<compile_context>
chip_gen: v7x
topology: tpu7x:2x2x1
jax: 0.10.0
libtpu: 0.0.40
codegen_flags: <defaults>
</compile_context>

<pallas_src>
import numpy as np
import jax
import jax.numpy as jnp
from jax.experimental import pallas as pl
from jax.experimental.pallas import tpu as pltpu


_N_SUMS = 6          # wce, p*q, q, p, p*qd, qd
_OUT_LANES = 8       # row-sum slab padded to 8 lanes


def _row_sums_kernel(q_ref, p_ref, out_ref):
    """Accumulate per-row lane sums of the 6 base quantities into out_ref.

    q_ref / p_ref : (NC, TILE) block of the flattened inputs (native dtype).
    out_ref       : (NC, 8) f32, resident across the whole reduction grid axis.
    """
    @pl.when(pl.program_id(0) == 0)
    def _init():
        out_ref[...] = jnp.zeros_like(out_ref)

    q = q_ref[...].astype(jnp.float32)
    p = p_ref[...].astype(jnp.float32)

    qd = jnp.where(q > 0.5, 1.0, 0.0)                  # hard-thresholded preds
    wce = -p * jnp.log(jnp.maximum(q, 1e-5))           # unweighted CE term

    def rs(x):                                         # lane-axis row sum
        return jnp.sum(x, axis=1, keepdims=True)       # (NC, 1)

    sums = (rs(wce), rs(p * q), rs(q), rs(p), rs(p * qd), rs(qd))

    # Scatter the 6 (NC,1) columns into the lane-packed (NC,8) accumulator
    # using pure VPU select/adds (no concatenate, no masked column stores).
    lane = jax.lax.broadcasted_iota(jnp.int32, out_ref.shape, 1)
    acc = jnp.zeros(out_ref.shape, jnp.float32)
    for j, v in enumerate(sums):
        acc = acc + jnp.where(lane == j, v, 0.0)
    out_ref[...] += acc


def _round_up(x, m):
    return ((x + m - 1) // m) * m


def my_loss(inputs, target, *, tile_hw=32768):
    """Pallas implementation of MyLoss.forward (returns myloss, dices, dice_weight)."""
    N, C, H, W = inputs.shape
    assert C == 4, "loss is defined for 4 channels"
    assert N == 4, "torch (4,1,1,1) weights broadcast over batch -> requires N == 4"
    NC, HW = N * C, H * W

    q2 = inputs.reshape(NC, HW)
    p2 = target.reshape(NC, HW)

    # Lane tile: multiple of 128, capped so per-block VMEM stays small
    # (NC=16 rows * 32768 lanes * 4 B = 2 MiB/block; ~8 MiB with 2 inputs
    # double-buffered -> safe on v5e/v6e/v7x without raising vmem limits).
    t = min(tile_hw, _round_up(HW, 128))
    hw_pad = _round_up(HW, t)
    if hw_pad != HW:
        # Zero padding contributes 0 to all six row sums (p=0, q=0 -> qd=0,
        # and -p*log(max(0,1e-5)) = 0).
        q2 = jnp.pad(q2, ((0, 0), (0, hw_pad - HW)))
        p2 = jnp.pad(p2, ((0, 0), (0, hw_pad - HW)))

    row_sums = pl.pallas_call(
        _row_sums_kernel,
        grid=(hw_pad // t,),
        in_specs=[
            pl.BlockSpec((NC, t), lambda i: (0, i)),
            pl.BlockSpec((NC, t), lambda i: (0, i)),
        ],
        out_specs=pl.BlockSpec((NC, _OUT_LANES), lambda i: (0, 0)),
        out_shape=jax.ShapeDtypeStruct((NC, _OUT_LANES), jnp.float32),
        compiler_params=pltpu.CompilerParams(
            dimension_semantics=("arbitrary",)),       # reduction axis
    )(q2, p2)

    # ---- finish the 16 scalar combinations on the tiny (NC, 8) slab ----
    s_wce = row_sums[:, 0]
    s_pq = row_sums[:, 1]
    s_q = row_sums[:, 2]
    s_p = row_sums[:, 3]
    s_pqd = row_sums[:, 4]
    s_qd = row_sums[:, 5]

    weight = jnp.array([0.1, 3.0, 6.0, 1.0], jnp.float32)    # per-batch (see note)
    weight_d = jnp.array([0.1, 6.0, 1.0, 1.0], jnp.float32)
    row_w = jnp.repeat(weight, C)      # row n*C + c gets weight[n]
    row_wd = jnp.repeat(weight_d, C)

    c_idx = jnp.arange(NC) % C
    m134 = (c_idx >= 1).astype(jnp.float32)
    m1 = (c_idx == 1).astype(jnp.float32)
    m2 = (c_idx == 2).astype(jnp.float32)
    m3 = (c_idx == 3).astype(jnp.float32)

    smooth = 1.0
    mean_wce = jnp.sum(s_wce * row_w) / (N * C * H * W)
    dice_mean = (2.0 * jnp.sum(s_pq * m134) + smooth) / (
        jnp.sum(s_q * m134) + jnp.sum(s_p * m134) + smooth)
    dice_weight = (2.0 * jnp.sum(s_pq * row_wd * m134) + smooth) / (
        jnp.sum(s_q * row_wd * m134) + jnp.sum(s_p * row_wd * m134) + smooth)
    diceloss = 1.0 - dice_mean

    def _dice(mk):
        return (2.0 * jnp.sum(s_pqd * mk) + smooth) / (
            jnp.sum(s_qd * mk) + jnp.sum(s_p * mk) + smooth)

    dice1, dice2, dice3 = _dice(m1), _dice(m2), _dice(m3)
    myloss = mean_wce + 0.1 * diceloss
    # TODO(synk): the torch module prints WBCE/Dice diagnostics host-side; omitted here.
    return myloss, (dice1, dice2, dice3), dice_weight


def my_loss_ref(inputs, target):
    """Pure-JAX reference replicating the torch forward exactly (for verification)."""
    q, p = inputs, target
    weight = jnp.array([0.1, 3.0, 6.0, 1.0], jnp.float32).reshape(4, 1, 1, 1)
    smooth = 1.0
    wce = -p * jnp.log(jnp.maximum(q, 1e-5)) * weight
    dice_mean = (2 * (p * q)[:, 1:4].sum() + smooth) / (q[:, 1:4].sum() + p[:, 1:4].sum() + smooth)
    diceloss = 1 - dice_mean
    qd = jnp.where(q > 0.5, 1.0, 0.0)
    dice1 = (2 * (p * qd)[:, 1].sum() + smooth) / (qd[:, 1].sum() + p[:, 1].sum() + smooth)
    dice2 = (2 * (p * qd)[:, 2].sum() + smooth) / (qd[:, 2].sum() + p[:, 2].sum() + smooth)
    dice3 = (2 * (p * qd)[:, 3].sum() + smooth) / (qd[:, 3].sum() + p[:, 3].sum() + smooth)
    myloss = jnp.mean(wce) + 0.1 * diceloss
    return myloss, (dice1, dice2, dice3)


if __name__ == "__main__":
    N, C, H, W = 4, 4, 16, 16   # N must equal 4 (weight broadcasts over batch dim)
    key = jax.random.PRNGKey(0)
    kq, kp = jax.random.split(key)
    inputs = jax.random.uniform(kq, (N, C, H, W), dtype=jnp.float32)           # probabilities
    target = (jax.random.uniform(kp, (N, C, H, W)) > 0.5).astype(jnp.float32)  # one-hot-ish mask

    myloss, dices_t, _dice_weight = my_loss(inputs, target)
    myloss = jax.block_until_ready(myloss)
    dices = np.array([float(d) for d in dices_t])

    ref_loss, ref_dices = my_loss_ref(inputs, target)
    np.testing.assert_allclose(float(myloss), float(ref_loss), rtol=1e-5, atol=1e-6)
    np.testing.assert_allclose(dices, np.array([float(d) for d in ref_dices]),
                               rtol=1e-5, atol=1e-6)
    print("KERNEL_OK")
</pallas_src>

<mosaic_0001>
module attributes {stable_mosaic.version = 11 : i64} {
  func.func @_row_sums_kernel(%arg0: i32, %arg1: memref<16x256xf32, #tpu.memory_space<vmem>>, %arg2: memref<16x256xf32, #tpu.memory_space<vmem>>, %arg3: memref<16x8xf32, #tpu.memory_space<vmem>>) attributes {dimension_semantics = [#tpu.dimension_semantics<arbitrary>], iteration_bounds = array<i64: 1>, scalar_prefetch = 0 : i64, scratch_operands = 0 : i64, tpu.core_type = #tpu.core_type<tc>, window_params = [{transform_indices = @transform_0, window_bounds = array<i64: 16, 256>}, {transform_indices = @transform_1, window_bounds = array<i64: 16, 256>}, {pipeline_mode = #tpu.pipeline_mode<synchronous>, transform_indices = @transform_2, window_bounds = array<i64: 16, 8>}]} {
    %c0_i32 = arith.constant 0 : i32
    %0 = arith.cmpi eq, %arg0, %c0_i32 : i32
    %1 = arith.extui %0 : i1 to i32
    %c0_i32_0 = arith.constant 0 : i32
    %2 = arith.cmpi ne, %1, %c0_i32_0 : i32
    scf.if %2 {
      %cst_26 = arith.constant 0.000000e+00 : f32
      %77 = vector.broadcast %cst_26 : f32 to vector<16x8xf32>
      %c0_27 = arith.constant 0 : index
      %c0_28 = arith.constant 0 : index
      %78 = vector.load %arg3[%c0_27, %c0_28] : memref<16x8xf32, #tpu.memory_space<vmem>>, vector<16x8xf32>
      tpu.vector_store %arg3[%c0_27, %c0_28], %77 {strides = array<i32>} : memref<16x8xf32, #tpu.memory_space<vmem>>, vector<16x8xf32>,
    } else {
    }
    %c0 = arith.constant 0 : index
    %c0_1 = arith.constant 0 : index
    %3 = vector.load %arg1[%c0, %c0_1] : memref<16x256xf32, #tpu.memory_space<vmem>>, vector<16x256xf32>
    %c0_2 = arith.constant 0 : index
    %c0_3 = arith.constant 0 : index
    %4 = vector.load %arg2[%c0_2, %c0_3] : memref<16x256xf32, #tpu.memory_space<vmem>>, vector<16x256xf32>
    %cst = arith.constant 5.000000e-01 : f32
    %5 = vector.broadcast %cst : f32 to vector<16x256xf32>
    %6 = arith.cmpf ogt, %3, %5 : vector<16x256xf32>
    %cst_4 = arith.constant 1.000000e+00 : f32
    %cst_5 = arith.constant 0.000000e+00 : f32
    %7 = vector.broadcast %cst_4 : f32 to vector<16x256xf32>
    %8 = vector.broadcast %cst_5 : f32 to vector<16x256xf32>
    %9 = arith.select %6, %7, %8 : vector<16x256xi1>, vector<16x256xf32>
    %cst_6 = arith.constant 0.000000e+00 : f32
    %10 = vector.broadcast %cst_6 : f32 to vector<16x256xf32>
    %11 = arith.subf %10, %4 : vector<16x256xf32>
    %cst_7 = arith.constant 9.99999974E-6 : f32
    %12 = vector.broadcast %cst_7 : f32 to vector<16x256xf32>
    %13 = arith.maximumf %3, %12 : vector<16x256xf32>
    %14 = math.log %13 : vector<16x256xf32>
    %15 = arith.mulf %11, %14 : vector<16x256xf32>
    %cst_8 = arith.constant dense<0.000000e+00> : vector<16xf32>
    %16 = vector.multi_reduction <add>, %15, %cst_8 [1] : vector<16x256xf32> to vector<16xf32>
    %17 = vector.shape_cast %16 : vector<16xf32> to vector<16x1xf32>
    %18 = arith.mulf %4, %3 : vector<16x256xf32>
    %cst_9 = arith.constant dense<0.000000e+00> : vector<16xf32>
    %19 = vector.multi_reduction <add>, %18, %cst_9 [1] : vector<16x256xf32> to vector<16xf32>
    %20 = vector.shape_cast %19 : vector<16xf32> to vector<16x1xf32>
    %cst_10 = arith.constant dense<0.000000e+00> : vector<16xf32>
    %21 = vector.multi_reduction <add>, %3, %cst_10 [1] : vector<16x256xf32> to vector<16xf32>
    %22 = vector.shape_cast %21 : vector<16xf32> to vector<16x1xf32>
    %cst_11 = arith.constant dense<0.000000e+00> : vector<16xf32>
    %23 = vector.multi_reduction <add>, %4, %cst_11 [1] : vector<16x256xf32> to vector<16xf32>
    %24 = vector.shape_cast %23 : vector<16xf32> to vector<16x1xf32>
    %25 = arith.mulf %4, %9 : vector<16x256xf32>
    %cst_12 = arith.constant dense<0.000000e+00> : vector<16xf32>
    %26 = vector.multi_reduction <add>, %25, %cst_12 [1] : vector<16x256xf32> to vector<16xf32>
    %27 = vector.shape_cast %26 : vector<16xf32> to vector<16x1xf32>
    %cst_13 = arith.constant dense<0.000000e+00> : vector<16xf32>
    %28 = vector.multi_reduction <add>, %9, %cst_13 [1] : vector<16x256xf32> to vector<16xf32>
    %29 = vector.shape_cast %28 : vector<16xf32> to vector<16x1xf32>
    %30 = tpu.iota {dimensions = array<i32: 1>} : vector<16x8xi32>
    %cst_14 = arith.constant 0.000000e+00 : f32
    %31 = vector.broadcast %cst_14 : f32 to vector<16x8xf32>
    %c0_i32_15 = arith.constant 0 : i32
    %32 = vector.broadcast %c0_i32_15 : i32 to vector<16x8xi32>
    %33 = arith.cmpi eq, %30, %32 : vector<16x8xi32>
    %cst_16 = arith.constant 0.000000e+00 : f32
    %34 = vector.shape_cast %17 : vector<16x1xf32> to vector<16x1xf32>
    %35 = vector.broadcast %34 : vector<16x1xf32> to vector<16x8xf32>
    %36 = vector.broadcast %cst_16 : f32 to vector<16x8xf32>
    %37 = arith.select %33, %35, %36 : vector<16x8xi1>, vector<16x8xf32>
    %38 = arith.addf %31, %37 : vector<16x8xf32>
    %c1_i32 = arith.constant 1 : i32
    %39 = vector.broadcast %c1_i32 : i32 to vector<16x8xi32>
    %40 = arith.cmpi eq, %30, %39 : vector<16x8xi32>
    %cst_17 = arith.constant 0.000000e+00 : f32
    %41 = vector.shape_cast %20 : vector<16x1xf32> to vector<16x1xf32>
    %42 = vector.broadcast %41 : vector<16x1xf32> to vector<16x8xf32>
    %43 = vector.broadcast %cst_17 : f32 to vector<16x8xf32>
    %44 = arith.select %40, %42, %43 : vector<16x8xi1>, vector<16x8xf32>
    %45 = arith.addf %38, %44 : vector<16x8xf32>
    %c2_i32 = arith.constant 2 : i32
    %46 = vector.broadcast %c2_i32 : i32 to vector<16x8xi32>
    %47 = arith.cmpi eq, %30, %46 : vector<16x8xi32>
    %cst_18 = arith.constant 0.000000e+00 : f32
    %48 = vector.shape_cast %22 : vector<16x1xf32> to vector<16x1xf32>
    %49 = vector.broadcast %48 : vector<16x1xf32> to vector<16x8xf32>
    %50 = vector.broadcast %cst_18 : f32 to vector<16x8xf32>
    %51 = arith.select %47, %49, %50 : vector<16x8xi1>, vector<16x8xf32>
    %52 = arith.addf %45, %51 : vector<16x8xf32>
    %c3_i32 = arith.constant 3 : i32
    %53 = vector.broadcast %c3_i32 : i32 to vector<16x8xi32>
    %54 = arith.cmpi eq, %30, %53 : vector<16x8xi32>
    %cst_19 = arith.constant 0.000000e+00 : f32
    %55 = vector.shape_cast %24 : vector<16x1xf32> to vector<16x1xf32>
    %56 = vector.broadcast %55 : vector<16x1xf32> to vector<16x8xf32>
    %57 = vector.broadcast %cst_19 : f32 to vector<16x8xf32>
    %58 = arith.select %54, %56, %57 : vector<16x8xi1>, vector<16x8xf32>
    %59 = arith.addf %52, %58 : vector<16x8xf32>
    %c4_i32 = arith.constant 4 : i32
    %60 = vector.broadcast %c4_i32 : i32 to vector<16x8xi32>
    %61 = arith.cmpi eq, %30, %60 : vector<16x8xi32>
    %cst_20 = arith.constant 0.000000e+00 : f32
    %62 = vector.shape_cast %27 : vector<16x1xf32> to vector<16x1xf32>
    %63 = vector.broadcast %62 : vector<16x1xf32> to vector<16x8xf32>
    %64 = vector.broadcast %cst_20 : f32 to vector<16x8xf32>
    %65 = arith.select %61, %63, %64 : vector<16x8xi1>, vector<16x8xf32>
    %66 = arith.addf %59, %65 : vector<16x8xf32>
    %c5_i32 = arith.constant 5 : i32
    %67 = vector.broadcast %c5_i32 : i32 to vector<16x8xi32>
    %68 = arith.cmpi eq, %30, %67 : vector<16x8xi32>
    %cst_21 = arith.constant 0.000000e+00 : f32
    %69 = vector.shape_cast %29 : vector<16x1xf32> to vector<16x1xf32>
    %70 = vector.broadcast %69 : vector<16x1xf32> to vector<16x8xf32>
    %71 = vector.broadcast %cst_21 : f32 to vector<16x8xf32>
    %72 = arith.select %68, %70, %71 : vector<16x8xi1>, vector<16x8xf32>
    %73 = arith.addf %66, %72 : vector<16x8xf32>
    %c0_22 = arith.constant 0 : index
    %c0_23 = arith.constant 0 : index
    %74 = vector.load %arg3[%c0_22, %c0_23] : memref<16x8xf32, #tpu.memory_space<vmem>>, vector<16x8xf32>
    %75 = arith.addf %74, %73 : vector<16x8xf32>
    %c0_24 = arith.constant 0 : index
    %c0_25 = arith.constant 0 : index
    %76 = vector.load %arg3[%c0_24, %c0_25] : memref<16x8xf32, #tpu.memory_space<vmem>>, vector<16x8xf32>
    tpu.vector_store %arg3[%c0_24, %c0_25], %75 {strides = array<i32>} : memref<16x8xf32, #tpu.memory_space<vmem>>, vector<16x8xf32>,
    return
  }
  func.func @transform_0(%arg0: i32) -> (i32, i32) {
    %c0_i32 = arith.constant 0 : i32
    %c0_i32_0 = arith.constant 0 : i32
    return %c0_i32, %arg0 : i32, i32
  }
  func.func @transform_1(%arg0: i32) -> (i32, i32) {
    %c0_i32 = arith.constant 0 : i32
    %c0_i32_0 = arith.constant 0 : i32
    return %c0_i32, %arg0 : i32, i32
  }
  func.func @transform_2(%arg0: i32) -> (i32, i32) {
    %c0_i32 = arith.constant 0 : i32
    %c0_i32_0 = arith.constant 0 : i32
    %c0_i32_1 = arith.constant 0 : i32
    return %c0_i32, %c0_i32_0 : i32, i32
  }
}

</mosaic_0001>

<llo_original>
// kernel: tpu_custom_call.1
$region0: #{tpu_custom_call.1}
  #allocation0 [shape = 'u32[]', space=smem, size = 0x4, offset = 0x4, fixed_abs, tag = 'smem constant byte address 0x4 - core index']
  #allocation1 [shape = 'u32[144,128]{1,0:T(1,128)}', space=vmem, size = 0x12000, scoped, tag = 'internal scratch']
  %s0 = inlined_call_operand.hbm [shape: f32[16,256], index: 0, kind: input, shape index: {}]
  %s1 = inlined_call_operand.hbm [shape: f32[16,256], index: 1, kind: input, shape index: {}]
  %s2 = inlined_call_operand.vmem [shape: f32[16,8], index: 2, kind: output, shape index: {}]
  %s3 = sld [smem:[#allocation0]]
  $region30: #{tpu_custom_call.1} parent=0
    _
  %s5 = ssub.s32 1, %s3
  %s6 = scalar_select 0, %s5, %s3
  $region1: #{tpu_custom_call.1} parent=0
    #allocation2 [shape = 'u8[16384]{0}', space=vmem, size = 0x4000, scoped, tag = 'input window, operand 0, single buffered']
    #allocation3 [shape = 's32[1]{0}', space=sflag, size = 0x4, scoped, tag = 'scoped memory for tpu_custom_call.1']
    #allocation4 [shape = 'u8[16384]{0}', space=vmem, size = 0x4000, scoped, tag = 'input window, operand 1, single buffered']
    #allocation5 [shape = 's32[1]{0}', space=sflag, size = 0x4, scoped, tag = 'scoped memory for tpu_custom_call.1']
    %7 = vsyncpa [#allocation3], 0
    %8 = vsyncpa [#allocation5], 0
    // Predicated region
    $region2: #{tpu_custom_call.1} parent=1 // pred_check
      _
    $region3: #{tpu_custom_call.1} parent=1 // pred_check_branch
      %10 = sbr.rel (0) target = $region5
    $region4: #{tpu_custom_call.1} parent=1 // pred_region
      %s12 = ssub.s32 512, 512
      %13 = vsyncadd [#allocation3], %s12
      %s14 = sshll.u32 [#allocation2], 4
      %s15 = int_to_ptr.vmem [resolvable:$true] %s14
      %20 = dma.hbm_to_vmem [thread:$0]  %s0, 512, %s15, [#allocation3], 256, 256, 16
    $region5: #{tpu_custom_call.1} parent=1 // pred_fallthru
      _
    // Predicated region
    $region6: #{tpu_custom_call.1} parent=1 // pred_check
      _
    $region7: #{tpu_custom_call.1} parent=1 // pred_check_branch
      %22 = sbr.rel (0) target = $region9
    $region8: #{tpu_custom_call.1} parent=1 // pred_region
      %s24 = ssub.s32 512, 512
      %25 = vsyncadd [#allocation5], %s24
      %s26 = sshll.u32 [#allocation4], 4
      %s27 = int_to_ptr.vmem [resolvable:$true] %s26
      %32 = dma.hbm_to_vmem [thread:$0]  %s1, 512, %s27, [#allocation5], 256, 256, 16
    $region9: #{tpu_custom_call.1} parent=1 // pred_fallthru
      _
    // Predicated region
    $region10: #{tpu_custom_call.1} parent=1 // pred_check
      _
    $region11: #{tpu_custom_call.1} parent=1 // pred_check_branch
      %34 = sbr.rel (0) target = $region13
    $region12: #{tpu_custom_call.1} parent=1 // pred_region
      %35 = dma.done [#allocation3], 512
    $region13: #{tpu_custom_call.1} parent=1 // pred_fallthru
      _
    // Predicated region
    $region14: #{tpu_custom_call.1} parent=1 // pred_check
      _
    $region15: #{tpu_custom_call.1} parent=1 // pred_check_branch
      %37 = sbr.rel (0) target = $region17
    $region16: #{tpu_custom_call.1} parent=1 // pred_region
      %38 = dma.done [#allocation5], 512
    $region17: #{tpu_custom_call.1} parent=1 // pred_fallthru
      _
    %p39 = scmp.eq.s32.totalorder 0, 0
    // Predicated region
    $region18: #{tpu_custom_call.1} parent=1 // pred_check
      %p40 = pneg %p39
    $region19: #{tpu_custom_call.1} parent=1 // pred_check_branch
      %42 = sbr.rel (%p40) target = $region21
    $region20: #{tpu_custom_call.1} parent=1 // pred_region
      %vm43 = vcmask 64512
      %44 = vst.msk [vmem:[%s2] sm:$0xff] %vm43, 0.0
      %45 = vst.msk [vmem:[%s2 + $0x8] sm:$0xff] %vm43, 0.0
    $region21: #{tpu_custom_call.1} parent=1 // pred_fallthru
      _
    %v46 = vld [vmem:[#allocation2] sm:$0xff]
    %v47 = vld [vmem:[#allocation2 + $0x8] sm:$0xff]
    %v48 = vld [vmem:[#allocation2 + $0x10] sm:$0xff]
    %v49 = vld [vmem:[#allocation2 + $0x18] sm:$0xff]
    %v50 = vld [vmem:[#allocation4] sm:$0xff]
    %v51 = vld [vmem:[#allocation4 + $0x8] sm:$0xff]
    %v52 = vld [vmem:[#allocation4 + $0x10] sm:$0xff]
    %v53 = vld [vmem:[#allocation4 + $0x18] sm:$0xff]
    %vm54 = vcmp.gt.f32.partialorder %v46, 0.5
    %vm55 = vcmp.gt.f32.partialorder %v47, 0.5
    %vm56 = vcmp.gt.f32.partialorder %v48, 0.5
    %vm57 = vcmp.gt.f32.partialorder %v49, 0.5
    %v58 = vsel %vm54, 1.0, 0.0
    %v59 = vsel %vm55, 1.0, 0.0
    %v60 = vsel %vm56, 1.0, 0.0
    %v61 = vsel %vm57, 1.0, 0.0
    %v62 = vsub.f32 0.0, %v50
    %v63 = vsub.f32 0.0, %v51
    %v64 = vsub.f32 0.0, %v52
    %v65 = vsub.f32 0.0, %v53
    %v66 = vmax.f32 %v46, 1e-05
    %v67 = vmax.f32 %v47, 1e-05
    %v68 = vmax.f32 %v48, 1e-05
    %v69 = vmax.f32 %v49, 1e-05
    %v70 = vlog2.pop %v66
    %v71 = vmul.f32 %v70, 0.6931472
    %v72 = vlog2.pop %v67
    %v73 = vmul.f32 %v72, 0.6931472
    %v74 = vlog2.pop %v68
    %v75 = vmul.f32 %v74, 0.6931472
    %v76 = vlog2.pop %v69
    %v77 = vmul.f32 %v76, 0.6931472
    %v78 = vmul.f32 %v62, %v71
    %v79 = vmul.f32 %v63, %v73
    %v80 = vmul.f32 %v64, %v75
    %v81 = vmul.f32 %v65, %v77
    %v82 = vadd.f32 %v78, %v79
    %83 = vadd.xlane.f32.xlu0 %v82
    %v84 = vpop.xlane.xlu0 %83
    %v85 = vadd.f32 %v80, %v81
    %86 = vadd.xlane.f32.xlu0 %v85
    %v87 = vpop.xlane.xlu0 %86
    %v88 = vmul.f32 %v50, %v46
    %v89 = vmul.f32 %v51, %v47
    %v90 = vmul.f32 %v52, %v48
    %v91 = vmul.f32 %v53, %v49
    %v92 = vadd.f32 %v88, %v89
    %93 = vadd.xlane.f32.xlu0 %v92
    %v94 = vpop.xlane.xlu0 %93
    %v95 = vadd.f32 %v90, %v91
    %96 = vadd.xlane.f32.xlu0 %v95
    %v97 = vpop.xlane.xlu0 %96
    %v98 = vadd.f32 %v46, %v47
    %99 = vadd.xlane.f32.xlu0 %v98
    %v100 = vpop.xlane.xlu0 %99
    %v101 = vadd.f32 %v48, %v49
    %102 = vadd.xlane.f32.xlu0 %v101
    %v103 = vpop.xlane.xlu0 %102
    %v104 = vadd.f32 %v50, %v51
    %105 = vadd.xlane.f32.xlu0 %v104
    %v106 = vpop.xlane.xlu0 %105
    %v107 = vadd.f32 %v52, %v53
    %108 = vadd.xlane.f32.xlu0 %v107
    %v109 = vpop.xlane.xlu0 %108
    %v110 = vmul.f32 %v50, %v58
    %v111 = vmul.f32 %v51, %v59
    %v112 = vmul.f32 %v52, %v60
    %v113 = vmul.f32 %v53, %v61
    %v114 = vadd.f32 %v110, %v111
    %115 = vadd.xlane.f32.xlu0 %v114
    %v116 = vpop.xlane.xlu0 %115
    %v117 = vadd.f32 %v112, %v113
    %118 = vadd.xlane.f32.xlu0 %v117
    %v119 = vpop.xlane.xlu0 %118
    %v120 = vadd.f32 %v58, %v59
    %121 = vadd.xlane.f32.xlu0 %v120
    %v122 = vpop.xlane.xlu0 %121
    %v123 = vadd.f32 %v60, %v61
    %124 = vadd.xlane.f32.xlu0 %v123
    %v125 = vpop.xlane.xlu0 %124
    %v126 = vlaneseq
    %v127 = vand.u32 %v126, 127
    %vm128 = vcmp.eq.s32.totalorder %v127, 0
    %v129 = vsel %vm128, %v84, 0.0
    %v130 = vsel %vm128, %v87, 0.0
    %v131 = vadd.f32 %v129, 0.0
    %v132 = vadd.f32 %v130, 0.0
    %vm133 = vcmp.eq.s32.totalorder %v127, 1
    %v134 = vsel %vm133, %v94, 0.0
    %v135 = vsel %vm133, %v97, 0.0
    %v136 = vadd.f32 %v131, %v134
    %v137 = vadd.f32 %v132, %v135
    %vm138 = vcmp.eq.s32.totalorder %v127, 2
    %v139 = vsel %vm138, %v100, 0.0
    %v140 = vsel %vm138, %v103, 0.0
    %v141 = vadd.f32 %v136, %v139
    %v142 = vadd.f32 %v137, %v140
    %vm143 = vcmp.eq.s32.totalorder %v127, 3
    %v144 = vsel %vm143, %v106, 0.0
    %v145 = vsel %vm143, %v109, 0.0
    %v146 = vadd.f32 %v141, %v144
    %v147 = vadd.f32 %v142, %v145
    %vm148 = vcmp.eq.s32.totalorder %v127, 4
    %v149 = vsel %vm148, %v116, 0.0
    %v150 = vsel %vm148, %v119, 0.0
    %v151 = vadd.f32 %v146, %v149
    %v152 = vadd.f32 %v147, %v150
    %vm153 = vcmp.eq.s32.totalorder %v127, 5
    %v154 = vsel %vm153, %v122, 0.0
    %v155 = vsel %vm153, %v125, 0.0
    %v156 = vadd.f32 %v151, %v154
    %v157 = vadd.f32 %v152, %v155
    %v158 = vld [vmem:[%s2] sm:$0xff]
    %v159 = vld [vmem:[%s2 + $0x8] sm:$0xff]
    %v160 = vadd.f32 %v158, %v156
    %v161 = vadd.f32 %v159, %v157
    %vm162 = vcmask 64512
    %163 = vst.msk [vmem:[%s2] sm:$0xff] %vm162, %v160
    %164 = vst.msk [vmem:[%s2 + $0x8] sm:$0xff] %vm162, %v161
    // Predicated region
    $region22: #{tpu_custom_call.1} parent=1 // pred_check
      _
    $region23: #{tpu_custom_call.1} parent=1 // pred_check_branch
      %166 = sbr.rel (0) target = $region25
    $region24: #{tpu_custom_call.1} parent=1 // pred_region
      _
    $region25: #{tpu_custom_call.1} parent=1 // pred_fallthru
      _
    // Predicated region
    $region26: #{tpu_custom_call.1} parent=1 // pred_check
      _
    $region27: #{tpu_custom_call.1} parent=1 // pred_check_branch
      %168 = sbr.rel (0) target = $region29
    $region28: #{tpu_custom_call.1} parent=1 // pred_region
      _
    $region29: #{tpu_custom_call.1} parent=1 // pred_fallthru
      _
    %169 = vsyncpa [#allocation3], 1
    %170 = vsyncpa [#allocation5], 1

</llo_original>
